<compile_context>
chip_gen: v6e
topology: v6e:2x2x1
jax: 0.10.0
libtpu: 0.0.40
codegen_flags: <defaults>
</compile_context>

<pallas_src>
import math

import jax
import jax.numpy as jnp
from jax import lax
from jax.experimental import pallas as pl
from jax.experimental.pallas import tpu as pltpu

STDV = 1.0 / math.sqrt(6.0)   # matches Initialization.uniform_initializer

# murmur3-style 32-bit mixing constants, written as their wrapped int32 values.
_M1 = -2048144789     # 0x85EBCA6B
_M2 = -1028477379     # 0xC2B2AE35
_GOLD = -1640531527   # 0x9E3779B9


def _mix32(x):
    """Murmur3 finalizer-style avalanche on int32 (wrap-around arithmetic)."""
    x = x ^ lax.shift_right_logical(x, jnp.int32(16))
    x = x * jnp.int32(_M1)
    x = x ^ lax.shift_right_logical(x, jnp.int32(13))
    x = x * jnp.int32(_M2)
    x = x ^ lax.shift_right_logical(x, jnp.int32(16))
    return x


def _uniform_init_kernel(seed_ref, out_ref):
    """Fill out_ref with uniform values in [-STDV, STDV) via a counter-based hash."""
    tm, tn = out_ref.shape
    i = pl.program_id(0)
    row = lax.broadcasted_iota(jnp.int32, (tm, tn), 0)
    col = lax.broadcasted_iota(jnp.int32, (tm, tn), 1)
    # Global element id (block offset folded in) -> tiling-invariant, per-block unique.
    lin = (i * tm + row) * tn + col
    x = lin ^ (seed_ref[0] * jnp.int32(_GOLD))
    x = _mix32(x)
    x = _mix32(x ^ jnp.int32(_GOLD))
    bits = x & jnp.int32(0x007FFFFF)                       # 23 uniform bits, >= 0
    f01 = bits.astype(jnp.float32) * jnp.float32(1.0 / 8388608.0)   # [0, 1)
    out_ref[...] = ((f01 - jnp.float32(0.5)) * jnp.float32(2.0 * STDV)).astype(out_ref.dtype)


def _flatten_2d(shape):
    if len(shape) == 0:
        return 1, 1
    if len(shape) == 1:
        return 1, int(shape[0])
    rows = 1
    for s in shape[:-1]:
        rows *= int(s)
    return rows, int(shape[-1])


def _choose_block_rows(rows, cols, itemsize, block_rows=None):
    if block_rows is None:
        target_bytes = 4 * 1024 * 1024            # ~4 MiB/block -> 8 MiB double-buffered,
        block_rows = max(1, target_bytes // max(1, cols * itemsize))  # safe on v5e/v6e/v7x
    block_rows = int(block_rows)
    if block_rows >= rows:
        return rows                               # single full block (full dims always legal)
    return max(8, (block_rows // 8) * 8)          # sublane-aligned tile; cols stays full (lane-dense)


def pallas_uniform_initializer(shape, seed, dtype=jnp.float32, block_rows=None):
    """Pallas equivalent of `nn.init.uniform_(x, a=-stdv, b=stdv)` (default init branch)."""
    shape = tuple(int(s) for s in shape)
    rows, cols = _flatten_2d(shape)
    itemsize = jnp.dtype(dtype).itemsize
    tm = _choose_block_rows(rows, cols, itemsize, block_rows)
    grid = (pl.cdiv(rows, tm),)

    if jax.default_backend() == "tpu":
        compiler_params = pltpu.CompilerParams(
            dimension_semantics=("parallel",),        # per-block seeds -> megacore-safe
            vmem_limit_bytes=32 * 1024 * 1024,
        )
    else:
        compiler_params = None                        # interpret / non-TPU fallback

    seed_arr = jnp.asarray([seed], dtype=jnp.int32)
    out2d = pl.pallas_call(
        _uniform_init_kernel,
        out_shape=jax.ShapeDtypeStruct((rows, cols), dtype),
        grid_spec=pltpu.PrefetchScalarGridSpec(
            num_scalar_prefetch=1,                    # seed lands in SMEM -> seed_ref
            grid=grid,
            in_specs=[],
            out_specs=pl.BlockSpec((tm, cols), lambda i, _seed: (i, 0)),
        ),
        compiler_params=compiler_params,
    )(seed_arr)
    return out2d.reshape(shape)


class Initialization:
    """Mirror of the PyTorch Initialization module (selector of init functions)."""

    def __init__(self, cfg):
        self.cfg = cfg

    def forward(self):
        # Only the default (uniform) branch carries tensor-level compute; it is the
        # Pallas kernel above.
        # TODO(synk): kaiming/xavier/orthogonal/sparse/trunc_normal branches are
        # selector-only in the reference and are not lowered to Pallas.
        def init_fn(shape, seed=0, dtype=jnp.float32, block_rows=None):
            return pallas_uniform_initializer(shape, seed, dtype, block_rows)

        return init_fn

    __call__ = forward


class NeuralNetwork:
    """Mirror of the abstract PyTorch NeuralNetwork base class."""

    def __init__(self, cfg):
        self.cfg = cfg
        self.Initialization = Initialization(cfg=cfg)

    def forward(self, *args, **kwargs):
        # Faithful to the reference: the base-class forward is abstract.
        raise NotImplementedError('The forward function must be implemented')


if __name__ == "__main__":
    cfg = {"initialization": "default"}
    net = NeuralNetwork(cfg)

    key = jax.random.PRNGKey(0)
    seed = int(jax.random.randint(key, (), 0, 2**31 - 1))

    init_fn = net.Initialization.forward()

    # Hidden-layer weight (hidden=32, fan_in=128) and a bias vector.
    w = jax.block_until_ready(init_fn((32, 128), seed=seed))
    b = jax.block_until_ready(init_fn((64,), seed=seed + 1))

    assert w.shape == (32, 128) and w.dtype == jnp.float32
    assert b.shape == (64,) and b.dtype == jnp.float32
    for t in (w, b):
        assert bool(jnp.all(t >= -STDV)) and bool(jnp.all(t <= STDV))
        assert float(jnp.std(t)) > 0.0

    # Exercise the tiled path: grid=(4,), blocks of (64, 128).  Values must be
    # identical to the single-block result (tiling-invariant hash) and the
    # row-blocks must differ from each other (per-block randomness).
    w_tiled = jax.block_until_ready(init_fn((256, 128), seed=seed, block_rows=64))
    w_full = jax.block_until_ready(init_fn((256, 128), seed=seed))
    assert bool(jnp.allclose(w_tiled, w_full))
    assert not bool(jnp.allclose(w_tiled[:64], w_tiled[64:128]))

    # The abstract forward must raise, as in the reference.
    try:
        net.forward()
        raise AssertionError("forward() should have raised NotImplementedError")
    except NotImplementedError:
        pass

    print("KERNEL_OK")
</pallas_src>

<mosaic_0001>
module attributes {stable_mosaic.version = 11 : i64} {
  func.func @_uniform_init_kernel(%arg0: i32, %arg1: memref<1xi32, #tpu.memory_space<smem>>, %arg2: memref<32x128xf32, #tpu.memory_space<vmem>>) attributes {dimension_semantics = [#tpu.dimension_semantics<arbitrary>], iteration_bounds = array<i64: 1>, scalar_prefetch = 1 : i64, scratch_operands = 0 : i64, tpu.core_type = #tpu.core_type<tc>, window_params = [{transform_indices = @transform_0, window_bounds = array<i64: 32, 128>}]} {
    %0 = tpu.iota {dimensions = array<i32: 0>} : vector<32x128xi32>
    %1 = tpu.iota {dimensions = array<i32: 1>} : vector<32x128xi32>
    %c32_i32 = arith.constant 32 : i32
    %2 = arith.muli %arg0, %c32_i32 : i32
    %3 = vector.broadcast %2 : i32 to vector<32x128xi32>
    %4 = arith.addi %3, %0 : vector<32x128xi32>
    %c128_i32 = arith.constant 128 : i32
    %5 = vector.broadcast %c128_i32 : i32 to vector<32x128xi32>
    %6 = arith.muli %4, %5 : vector<32x128xi32>
    %7 = arith.addi %6, %1 : vector<32x128xi32>
    %c0 = arith.constant 0 : index
    %8 = memref.load %arg1[%c0] : memref<1xi32, #tpu.memory_space<smem>>
    %c-1640531527_i32 = arith.constant -1640531527 : i32
    %9 = arith.muli %8, %c-1640531527_i32 : i32
    %10 = vector.broadcast %9 : i32 to vector<32x128xi32>
    %11 = arith.xori %7, %10 : vector<32x128xi32>
    %c16_i32 = arith.constant 16 : i32
    %12 = vector.broadcast %c16_i32 : i32 to vector<32x128xi32>
    %13 = arith.shrui %11, %12 : vector<32x128xi32>
    %14 = arith.xori %11, %13 : vector<32x128xi32>
    %c-2048144789_i32 = arith.constant -2048144789 : i32
    %15 = vector.broadcast %c-2048144789_i32 : i32 to vector<32x128xi32>
    %16 = arith.muli %14, %15 : vector<32x128xi32>
    %c13_i32 = arith.constant 13 : i32
    %17 = vector.broadcast %c13_i32 : i32 to vector<32x128xi32>
    %18 = arith.shrui %16, %17 : vector<32x128xi32>
    %19 = arith.xori %16, %18 : vector<32x128xi32>
    %c-1028477379_i32 = arith.constant -1028477379 : i32
    %20 = vector.broadcast %c-1028477379_i32 : i32 to vector<32x128xi32>
    %21 = arith.muli %19, %20 : vector<32x128xi32>
    %c16_i32_0 = arith.constant 16 : i32
    %22 = vector.broadcast %c16_i32_0 : i32 to vector<32x128xi32>
    %23 = arith.shrui %21, %22 : vector<32x128xi32>
    %24 = arith.xori %21, %23 : vector<32x128xi32>
    %c-1640531527_i32_1 = arith.constant -1640531527 : i32
    %25 = vector.broadcast %c-1640531527_i32_1 : i32 to vector<32x128xi32>
    %26 = arith.xori %24, %25 : vector<32x128xi32>
    %c16_i32_2 = arith.constant 16 : i32
    %27 = vector.broadcast %c16_i32_2 : i32 to vector<32x128xi32>
    %28 = arith.shrui %26, %27 : vector<32x128xi32>
    %29 = arith.xori %26, %28 : vector<32x128xi32>
    %c-2048144789_i32_3 = arith.constant -2048144789 : i32
    %30 = vector.broadcast %c-2048144789_i32_3 : i32 to vector<32x128xi32>
    %31 = arith.muli %29, %30 : vector<32x128xi32>
    %c13_i32_4 = arith.constant 13 : i32
    %32 = vector.broadcast %c13_i32_4 : i32 to vector<32x128xi32>
    %33 = arith.shrui %31, %32 : vector<32x128xi32>
    %34 = arith.xori %31, %33 : vector<32x128xi32>
    %c-1028477379_i32_5 = arith.constant -1028477379 : i32
    %35 = vector.broadcast %c-1028477379_i32_5 : i32 to vector<32x128xi32>
    %36 = arith.muli %34, %35 : vector<32x128xi32>
    %c16_i32_6 = arith.constant 16 : i32
    %37 = vector.broadcast %c16_i32_6 : i32 to vector<32x128xi32>
    %38 = arith.shrui %36, %37 : vector<32x128xi32>
    %39 = arith.xori %36, %38 : vector<32x128xi32>
    %c8388607_i32 = arith.constant 8388607 : i32
    %40 = vector.broadcast %c8388607_i32 : i32 to vector<32x128xi32>
    %41 = arith.andi %39, %40 : vector<32x128xi32>
    %42 = arith.sitofp %41 : vector<32x128xi32> to vector<32x128xf32>
    %cst = arith.constant 1.1920929E-7 : f32
    %43 = vector.broadcast %cst : f32 to vector<32x128xf32>
    %44 = arith.mulf %42, %43 : vector<32x128xf32>
    %cst_7 = arith.constant 5.000000e-01 : f32
    %45 = vector.broadcast %cst_7 : f32 to vector<32x128xf32>
    %46 = arith.subf %44, %45 : vector<32x128xf32>
    %cst_8 = arith.constant 0.816496611 : f32
    %47 = vector.broadcast %cst_8 : f32 to vector<32x128xf32>
    %48 = arith.mulf %46, %47 : vector<32x128xf32>
    %c0_9 = arith.constant 0 : index
    %c0_10 = arith.constant 0 : index
    %49 = vector.load %arg2[%c0_9, %c0_10] : memref<32x128xf32, #tpu.memory_space<vmem>>, vector<32x128xf32>
    tpu.vector_store %arg2[%c0_9, %c0_10], %48 {strides = array<i32>} : memref<32x128xf32, #tpu.memory_space<vmem>>, vector<32x128xf32>,
    return
  }
  func.func @transform_0(%arg0: i32, %arg1: memref<1xi32, #tpu.memory_space<smem>>) -> (i32, i32) {
    %c0_i32 = arith.constant 0 : i32
    %c0_i32_0 = arith.constant 0 : i32
    return %arg0, %c0_i32 : i32, i32
  }
}

</mosaic_0001>

<llo_original>
// kernel: tpu_custom_call.1
$region0: #{tpu_custom_call.1}
  #allocation0 [shape = 'u32[]', space=smem, size = 0x4, offset = 0x4, fixed_abs, tag = 'smem constant byte address 0x4 - core index']
  #allocation1 [shape = 'u32[144,128]{1,0:T(1,128)}', space=vmem, size = 0x12000, scoped, tag = 'internal scratch']
  #allocation2 [shape = 's32[1]{0}', space=sflag, size = 0x4, scoped, tag = 'scoped memory for tpu_custom_call.1']
  #allocation3 [shape = 's32[1]{0:T(128)S(6)}', space=smem, size = 0x200, scoped, tag = 'prefetched SMEM operand 0']
  %s0 = inlined_call_operand.<no memory space> [shape: s32[1], index: 0, kind: input, shape index: {}]
  %s1 = inlined_call_operand.hbm [shape: f32[32,128], index: 1, kind: output, shape index: {}]
  %s2 = sld [smem:[#allocation0]]
  $region10: #{tpu_custom_call.1} parent=0
    _
  %s4 = ssub.s32 1, %s2
  %s5 = scalar_select 0, %s4, %s2
  %6 = sst [smem:[#allocation3]] %s0
  $region1: #{tpu_custom_call.1} parent=0
    #allocation4 [shape = 'u8[16384]{0}', space=vmem, size = 0x4000, scoped, tag = 'output window, operand 0, single buffered']
    #allocation5 [shape = 's32[1]{0}', space=sflag, size = 0x4, scoped, tag = 'scoped memory for tpu_custom_call.1']
    %7 = vsyncpa [#allocation5], 0
    %v8 = vlaneseq
    %v9 = vshrl.u32 %v8, 7
    %v10 = vadd.s32 %v9, 8
    %v11 = vadd.s32 %v9, 16
    %v12 = vadd.s32 %v9, 24
    %v13 = vlaneseq
    %v14 = vand.u32 %v13, 127
    %s15 = smul.u32 0, 32
    %v16 = vstv %s15
    %v17 = vadd.s32 %v16, %v9
    %v18 = vadd.s32 %v16, %v10
    %v19 = vadd.s32 %v16, %v11
    %v20 = vadd.s32 %v16, %v12
    %v21 = vmul.u32 %v17, 128
    %v22 = vmul.u32 %v18, 128
    %v23 = vmul.u32 %v19, 128
    %v24 = vmul.u32 %v20, 128
    %v25 = vadd.s32 %v21, %v14
    %v26 = vadd.s32 %v22, %v14
    %v27 = vadd.s32 %v23, %v14
    %v28 = vadd.s32 %v24, %v14
    %s29 = sld [smem:[#allocation3]]
    %s30 = smul.u32 %s29, 2654435769
    %v31 = vstv %s30
    %v32 = vxor.u32 %v25, %v31
    %v33 = vxor.u32 %v26, %v31
    %v34 = vxor.u32 %v27, %v31
    %v35 = vxor.u32 %v28, %v31
    %v36 = vshrl.u32 %v32, 16
    %v37 = vshrl.u32 %v33, 16
    %v38 = vshrl.u32 %v34, 16
    %v39 = vshrl.u32 %v35, 16
    %v40 = vxor.u32 %v32, %v36
    %v41 = vxor.u32 %v33, %v37
    %v42 = vxor.u32 %v34, %v38
    %v43 = vxor.u32 %v35, %v39
    %v44 = vmul.u32 %v40, 2246822507
    %v45 = vmul.u32 %v41, 2246822507
    %v46 = vmul.u32 %v42, 2246822507
    %v47 = vmul.u32 %v43, 2246822507
    %v48 = vshrl.u32 %v44, 13
    %v49 = vshrl.u32 %v45, 13
    %v50 = vshrl.u32 %v46, 13
    %v51 = vshrl.u32 %v47, 13
    %v52 = vxor.u32 %v44, %v48
    %v53 = vxor.u32 %v45, %v49
    %v54 = vxor.u32 %v46, %v50
    %v55 = vxor.u32 %v47, %v51
    %v56 = vmul.u32 %v52, 3266489917
    %v57 = vmul.u32 %v53, 3266489917
    %v58 = vmul.u32 %v54, 3266489917
    %v59 = vmul.u32 %v55, 3266489917
    %v60 = vshrl.u32 %v56, 16
    %v61 = vshrl.u32 %v57, 16
    %v62 = vshrl.u32 %v58, 16
    %v63 = vshrl.u32 %v59, 16
    %v64 = vxor.u32 %v56, %v60
    %v65 = vxor.u32 %v57, %v61
    %v66 = vxor.u32 %v58, %v62
    %v67 = vxor.u32 %v59, %v63
    %v68 = vxor.u32 %v64, 2654435769
    %v69 = vxor.u32 %v65, 2654435769
    %v70 = vxor.u32 %v66, 2654435769
    %v71 = vxor.u32 %v67, 2654435769
    %v72 = vshrl.u32 %v68, 16
    %v73 = vshrl.u32 %v69, 16
    %v74 = vshrl.u32 %v70, 16
    %v75 = vshrl.u32 %v71, 16
    %v76 = vxor.u32 %v68, %v72
    %v77 = vxor.u32 %v69, %v73
    %v78 = vxor.u32 %v70, %v74
    %v79 = vxor.u32 %v71, %v75
    %v80 = vmul.u32 %v76, 2246822507
    %v81 = vmul.u32 %v77, 2246822507
    %v82 = vmul.u32 %v78, 2246822507
    %v83 = vmul.u32 %v79, 2246822507
    %v84 = vshrl.u32 %v80, 13
    %v85 = vshrl.u32 %v81, 13
    %v86 = vshrl.u32 %v82, 13
    %v87 = vshrl.u32 %v83, 13
    %v88 = vxor.u32 %v80, %v84
    %v89 = vxor.u32 %v81, %v85
    %v90 = vxor.u32 %v82, %v86
    %v91 = vxor.u32 %v83, %v87
    %v92 = vmul.u32 %v88, 3266489917
    %v93 = vmul.u32 %v89, 3266489917
    %v94 = vmul.u32 %v90, 3266489917
    %v95 = vmul.u32 %v91, 3266489917
    %v96 = vshrl.u32 %v92, 16
    %v97 = vshrl.u32 %v93, 16
    %v98 = vshrl.u32 %v94, 16
    %v99 = vshrl.u32 %v95, 16
    %v100 = vxor.u32 %v92, %v96
    %v101 = vxor.u32 %v93, %v97
    %v102 = vxor.u32 %v94, %v98
    %v103 = vxor.u32 %v95, %v99
    %v104 = vand.u32 %v100, 8388607
    %v105 = vand.u32 %v101, 8388607
    %v106 = vand.u32 %v102, 8388607
    %v107 = vand.u32 %v103, 8388607
    %v108 = vcvt.s32.f32 %v104
    %v109 = vcvt.s32.f32 %v105
    %v110 = vcvt.s32.f32 %v106
    %v111 = vcvt.s32.f32 %v107
    %v112 = vmul.f32 %v108, 1.1920929e-07
    %v113 = vmul.f32 %v109, 1.1920929e-07
    %v114 = vmul.f32 %v110, 1.1920929e-07
    %v115 = vmul.f32 %v111, 1.1920929e-07
    %v116 = vsub.f32 %v112, 0.5
    %v117 = vsub.f32 %v113, 0.5
    %v118 = vsub.f32 %v114, 0.5
    %v119 = vsub.f32 %v115, 0.5
    %v120 = vmul.f32 %v116, 0.8164966
    %v121 = vmul.f32 %v117, 0.8164966
    %v122 = vmul.f32 %v118, 0.8164966
    %v123 = vmul.f32 %v119, 0.8164966
    %124 = vst [vmem:[#allocation4] sm:$0xff] %v120
    %125 = vst [vmem:[#allocation4 + $0x8] sm:$0xff] %v121
    %126 = vst [vmem:[#allocation4 + $0x10] sm:$0xff] %v122
    %127 = vst [vmem:[#allocation4 + $0x18] sm:$0xff] %v123
    // Predicated region
    $region2: #{tpu_custom_call.1} parent=1 // pred_check
      _
    $region3: #{tpu_custom_call.1} parent=1 // pred_check_branch
      %129 = sbr.rel (0) target = $region5
    $region4: #{tpu_custom_call.1} parent=1 // pred_region
      %s131 = ssub.s32 512, 512
      %132 = vsyncadd [#allocation5], %s131
      %s133 = sshll.u32 [#allocation4], 4
      %s134 = int_to_ptr.vmem [resolvable:$true] %s133
      %139 = dma.vmem_to_hbm [thread:$0]  %s134, 512, %s1, [#allocation5], 128, 128, 8
    $region5: #{tpu_custom_call.1} parent=1 // pred_fallthru
      _
    // Predicated region
    $region6: #{tpu_custom_call.1} parent=1 // pred_check
      _
    $region7: #{tpu_custom_call.1} parent=1 // pred_check_branch
      %141 = sbr.rel (0) target = $region9
    $region8: #{tpu_custom_call.1} parent=1 // pred_region
      %142 = dma.done [#allocation5], 512
    $region9: #{tpu_custom_call.1} parent=1 // pred_fallthru
      _
    %143 = vsyncpa [#allocation5], 1

</llo_original>
